<compile_context>
chip_gen: v6e
topology: v6e:2x2x1
jax: 0.10.0
libtpu: 0.0.40
codegen_flags: <defaults>
</compile_context>

<pallas_src>
import jax
import jax.numpy as jnp
from jax.experimental import pallas as pl
from jax.experimental.pallas import tpu as pltpu

B = 2            # batch
C_OUT = 6        # conv output channels
H_IN = W_IN = 32
KH = KW = 3
H_CONV = W_CONV = 30   # 32 - 3 + 1
H_POOL = W_POOL = 15   # 30 // 2
FC_IN = C_OUT * H_POOL * W_POOL   # 1350
FC_OUT = 10


def net_kernel(xs_ref, cm_ref, cb_ref, colsel_ref, rowsel_ref,
               wm_ref, dmask_ref, rsum_ref, gather_ref, fcb_ref, o_ref):
    # xs_ref     : VMEM (B*32, 32)    batch stacked along sublanes (wrapper reshape)
    # cm_ref     : VMEM (3, 32, 180)  conv weights as per-ky matmul matrices (kx-shift folded in)
    # cb_ref     : VMEM (1, 180)      conv bias broadcast to the channel-stacked lanes
    # colsel_ref : VMEM (179, 90)     column-pool selection/placement matrix
    # rowsel_ref : VMEM (B*15, HS-1)  row-pool selection matrix (also strips batch pad rows)
    # wm_ref     : VMEM (90, 150)     fc1 weight with the NCHW flatten folded in
    # dmask_ref  : VMEM (B*15, 150)   r==r' diagonal mask
    # rsum_ref   : VMEM (B, B*15)     per-image row-sum selector
    # gather_ref : VMEM (150, 10)     output gather (k%10 == o)
    # fcb_ref    : VMEM (1, 10)       fc1 bias
    # o_ref      : VMEM (B, 10)       final output
    f32 = jnp.float32
    hs = xs_ref.shape[0] - (KH - 1)          # stacked conv height = (B-1)*32 + 30

    xs = xs_ref[...]                          # (B*32, 32)

    # ---- conv1 + bias + ReLU: 3 MXU matmuls over the whole batch ------------------
    # conv[i, c*30+j] = sum_{ky,kx} xs[i+ky, j+kx] * w[c,0,ky,kx]
    # (rows 30/31 of each 32-row image block are cross-image junk; never selected later)
    conv = jnp.dot(xs[0:hs, :], cm_ref[0], preferred_element_type=f32)
    conv = conv + jnp.dot(xs[1:hs + 1, :], cm_ref[1], preferred_element_type=f32)
    conv = conv + jnp.dot(xs[2:hs + 2, :], cm_ref[2], preferred_element_type=f32)
    conv = jnp.maximum(conv + cb_ref[...], 0.0)                         # (hs, 180)

    # ---- 2x2 / stride-2 max-pool: shift+max then ONE selection matmul per axis ----
    # column pool (lane axis): pair lane l with l+1, select lanes c*30+2q.
    cmax = jnp.maximum(conv[:, :-1], conv[:, 1:])                       # (hs, 179)
    colp = jnp.dot(cmax, colsel_ref[...], preferred_element_type=f32)   # (hs, 90)
    # row pool (sublane axis): pair row i with i+1, select rows n*32+2r.
    rmax = jnp.maximum(colp[:-1, :], colp[1:, :])                       # (hs-1, 90)
    pooled = jnp.dot(rowsel_ref[...], rmax, preferred_element_type=f32) # (B*15, 90)
    # (second ReLU of the torch module is a numerical no-op here: pooled >= 0 already)

    # ---- fc1 with the NCHW flatten folded into wm ----------------------------------
    # out[n,o] = sum_r t[n*15+r, r*10+o] + bias[o]
    t = jnp.dot(pooled, wm_ref[...], preferred_element_type=f32)        # (B*15, 150)
    g = jnp.dot(rsum_ref[...], t * dmask_ref[...],
                preferred_element_type=f32)                             # (B, 150)
    o_ref[...] = (jnp.dot(g, gather_ref[...], preferred_element_type=f32)
                  + fcb_ref[...])                                       # (B, 10), one dense store


def _build_constants(conv_w, conv_b, fc_w, fc_b, batch):
    """Wrapper-side (parameter-only) construction of all matmul matrices / masks."""
    f32 = jnp.float32
    hs = (batch - 1) * H_IN + H_CONV          # stacked conv height

    # conv-as-matmul weights: convmat[ky][col, c*30+j] = w[c,0,ky,col-j] if 0<=col-j<3 else 0
    col = jnp.arange(W_IN)[:, None]                              # (32, 1)
    lane = jnp.arange(C_OUT * W_CONV)[None, :]                   # (1, 180)
    c_idx = lane // W_CONV
    j_idx = lane % W_CONV
    kx = col - j_idx                                             # (32, 180)
    valid = (kx >= 0) & (kx < KW)
    kxc = jnp.clip(kx, 0, KW - 1)
    convmat = jnp.stack(
        [jnp.where(valid, conv_w[c_idx, 0, ky, kxc], 0.0) for ky in range(KH)],
        axis=0).astype(f32)                                      # (3, 32, 180)

    cbias = jnp.repeat(conv_b, W_CONV)[None, :].astype(f32)      # (1, 180)

    # column-pool selector: colsel[c*30+j, c'*15+q] = 1 iff c==c' and j==2q
    src = jnp.arange(C_OUT * W_CONV - 1)[:, None]                # (179, 1)
    dst = jnp.arange(C_OUT * W_POOL)[None, :]                    # (1, 90)
    colsel = ((src // W_CONV == dst // W_POOL) &
              (src % W_CONV == 2 * (dst % W_POOL))).astype(f32)  # (179, 90)

    # row-pool selector: rowsel[n*15+r, i] = 1 iff i == n*32 + 2r
    r = jnp.arange(batch * H_POOL)[:, None]                      # (B*15, 1)
    i = jnp.arange(hs - 1)[None, :]                              # (1, hs-1)
    rowsel = (i == (r // H_POOL) * H_IN + 2 * (r % H_POOL)).astype(f32)

    # fc1 weight with the NCHW flatten folded in:
    #   wm[c*15+q, r*10+o] = fc_w[o, c*225 + r*15 + q]
    wm = (fc_w.reshape(FC_OUT, C_OUT, H_POOL, W_POOL)
              .transpose(1, 3, 2, 0)
              .reshape(C_OUT * W_POOL, H_POOL * FC_OUT)).astype(f32)   # (90, 150)

    # diagonal mask (r == r') and per-image row-sum selector and output gather
    row = jnp.arange(batch * H_POOL)[:, None]                    # (B*15, 1)
    k = jnp.arange(H_POOL * FC_OUT)[None, :]                     # (1, 150)
    dmask = (k // FC_OUT == row % H_POOL).astype(f32)            # (B*15, 150)

    n = jnp.arange(batch)[:, None]                               # (B, 1)
    rowidx = jnp.arange(batch * H_POOL)[None, :]                 # (1, B*15)
    rsum = (rowidx // H_POOL == n).astype(f32)                   # (B, B*15)

    gk = jnp.arange(H_POOL * FC_OUT)[:, None]
    go = jnp.arange(FC_OUT)[None, :]
    gather = (gk % FC_OUT == go).astype(f32)                     # (150, 10)

    fcb = fc_b.reshape(1, FC_OUT).astype(f32)                    # (1, 10)
    return convmat, cbias, colsel, rowsel, wm, dmask, rsum, gather, fcb


def net_forward(x, conv_w, conv_b, fc_w, fc_b):
    batch = x.shape[0]
    consts = _build_constants(conv_w, conv_b, fc_w, fc_b, batch)
    xs = x.reshape(batch * H_IN, W_IN)                           # batch stacked along sublanes

    vmem = pl.BlockSpec(memory_space=pltpu.MemorySpace.VMEM)
    return pl.pallas_call(
        net_kernel,
        out_shape=jax.ShapeDtypeStruct((batch, FC_OUT), jnp.float32),
        in_specs=[vmem] * (1 + len(consts)),
        out_specs=vmem,
    )(xs, *consts)


def reference_forward(x, conv_w, conv_b, fc_w, fc_b):
    y = jax.lax.conv_general_dilated(
        x, conv_w, window_strides=(1, 1), padding="VALID",
        dimension_numbers=("NCHW", "OIHW", "NCHW"))
    y = y + conv_b.reshape(1, C_OUT, 1, 1)
    y = jnp.maximum(y, 0.0)
    y = jax.lax.reduce_window(y, -jnp.inf, jax.lax.max,
                              (1, 1, 2, 2), (1, 1, 2, 2), "VALID")
    y = jnp.maximum(y, 0.0)
    y = y.reshape(y.shape[0], -1)
    return y @ fc_w.T + fc_b


if __name__ == "__main__":
    key = jax.random.PRNGKey(0)
    k1, k2, k3, k4, k5 = jax.random.split(key, 5)

    # PyTorch-style uniform(-1/sqrt(fan_in), 1/sqrt(fan_in)) init, deterministic.
    bc = 1.0 / (1 * KH * KW) ** 0.5
    conv_w = jax.random.uniform(k1, (C_OUT, 1, KH, KW), jnp.float32, -bc, bc)
    conv_b = jax.random.uniform(k2, (C_OUT,), jnp.float32, -bc, bc)
    bf = 1.0 / FC_IN ** 0.5
    fc_w = jax.random.uniform(k3, (FC_OUT, FC_IN), jnp.float32, -bf, bf)
    fc_b = jax.random.uniform(k4, (FC_OUT,), jnp.float32, -bf, bf)

    x = jax.random.normal(k5, (B, 1, H_IN, W_IN), jnp.float32)

    out = jax.jit(net_forward)(x, conv_w, conv_b, fc_w, fc_b)
    out = jax.block_until_ready(out)

    ref = reference_forward(x, conv_w, conv_b, fc_w, fc_b)
    assert out.shape == (B, FC_OUT)
    assert jnp.allclose(out, ref, atol=1e-4, rtol=1e-4), (out, ref)

    print("KERNEL_OK")
</pallas_src>

<mosaic_0001>
module attributes {stable_mosaic.version = 11 : i64} {
  func.func @net_kernel(%arg0: memref<64x32xf32, #tpu.memory_space<vmem>>, %arg1: memref<3x32x180xf32, #tpu.memory_space<vmem>>, %arg2: memref<1x180xf32, #tpu.memory_space<vmem>>, %arg3: memref<179x90xf32, #tpu.memory_space<vmem>>, %arg4: memref<30x61xf32, #tpu.memory_space<vmem>>, %arg5: memref<90x150xf32, #tpu.memory_space<vmem>>, %arg6: memref<30x150xf32, #tpu.memory_space<vmem>>, %arg7: memref<2x30xf32, #tpu.memory_space<vmem>>, %arg8: memref<150x10xf32, #tpu.memory_space<vmem>>, %arg9: memref<1x10xf32, #tpu.memory_space<vmem>>, %arg10: memref<2x10xf32, #tpu.memory_space<vmem>>) attributes {dimension_semantics = [], scalar_prefetch = 0 : i64, scratch_operands = 0 : i64, tpu.core_type = #tpu.core_type<tc>} {
    %c0 = arith.constant 0 : index
    %c0_0 = arith.constant 0 : index
    %0 = vector.load %arg0[%c0, %c0_0] : memref<64x32xf32, #tpu.memory_space<vmem>>, vector<64x32xf32>
    %1 = vector.extract_strided_slice %0 {offsets = [0, 0], sizes = [62, 32], strides = [1, 1]} : vector<64x32xf32> to vector<62x32xf32>
    %c0_1 = arith.constant 0 : index
    %c0_2 = arith.constant 0 : index
    %c0_3 = arith.constant 0 : index
    %2 = vector.load %arg1[%c0_1, %c0_2, %c0_3] : memref<3x32x180xf32, #tpu.memory_space<vmem>>, vector<1x32x180xf32>
    %3 = vector.shape_cast %2 : vector<1x32x180xf32> to vector<32x180xf32>
    %cst = arith.constant dense<0.000000e+00> : vector<62x180xf32>
    %4 = tpu.matmul %1, %3, %cst {dimension_numbers = #tpu.dot_dimension_numbers<[1], [0], [0], [1], [0, 0, 1, 1], [], []>} : vector<62x32xf32>, vector<32x180xf32>, vector<62x180xf32> -> vector<62x180xf32>
    %5 = vector.extract_strided_slice %0 {offsets = [1, 0], sizes = [62, 32], strides = [1, 1]} : vector<64x32xf32> to vector<62x32xf32>
    %c1 = arith.constant 1 : index
    %c0_4 = arith.constant 0 : index
    %c0_5 = arith.constant 0 : index
    %6 = vector.load %arg1[%c1, %c0_4, %c0_5] : memref<3x32x180xf32, #tpu.memory_space<vmem>>, vector<1x32x180xf32>
    %7 = vector.shape_cast %6 : vector<1x32x180xf32> to vector<32x180xf32>
    %cst_6 = arith.constant dense<0.000000e+00> : vector<62x180xf32>
    %8 = tpu.matmul %5, %7, %cst_6 {dimension_numbers = #tpu.dot_dimension_numbers<[1], [0], [0], [1], [0, 0, 1, 1], [], []>} : vector<62x32xf32>, vector<32x180xf32>, vector<62x180xf32> -> vector<62x180xf32>
    %9 = arith.addf %4, %8 : vector<62x180xf32>
    %10 = vector.extract_strided_slice %0 {offsets = [2, 0], sizes = [62, 32], strides = [1, 1]} : vector<64x32xf32> to vector<62x32xf32>
    %c2 = arith.constant 2 : index
    %c0_7 = arith.constant 0 : index
    %c0_8 = arith.constant 0 : index
    %11 = vector.load %arg1[%c2, %c0_7, %c0_8] : memref<3x32x180xf32, #tpu.memory_space<vmem>>, vector<1x32x180xf32>
    %12 = vector.shape_cast %11 : vector<1x32x180xf32> to vector<32x180xf32>
    %cst_9 = arith.constant dense<0.000000e+00> : vector<62x180xf32>
    %13 = tpu.matmul %10, %12, %cst_9 {dimension_numbers = #tpu.dot_dimension_numbers<[1], [0], [0], [1], [0, 0, 1, 1], [], []>} : vector<62x32xf32>, vector<32x180xf32>, vector<62x180xf32> -> vector<62x180xf32>
    %14 = arith.addf %9, %13 : vector<62x180xf32>
    %c0_10 = arith.constant 0 : index
    %c0_11 = arith.constant 0 : index
    %15 = vector.load %arg2[%c0_10, %c0_11] : memref<1x180xf32, #tpu.memory_space<vmem>>, vector<1x180xf32>
    %16 = vector.broadcast %15 : vector<1x180xf32> to vector<62x180xf32>
    %17 = arith.addf %14, %16 : vector<62x180xf32>
    %cst_12 = arith.constant 0.000000e+00 : f32
    %18 = vector.broadcast %cst_12 : f32 to vector<62x180xf32>
    %19 = arith.maximumf %17, %18 : vector<62x180xf32>
    %20 = vector.extract_strided_slice %19 {offsets = [0, 0], sizes = [62, 179], strides = [1, 1]} : vector<62x180xf32> to vector<62x179xf32>
    %21 = vector.extract_strided_slice %19 {offsets = [0, 1], sizes = [62, 179], strides = [1, 1]} : vector<62x180xf32> to vector<62x179xf32>
    %22 = arith.maximumf %20, %21 : vector<62x179xf32>
    %c0_13 = arith.constant 0 : index
    %c0_14 = arith.constant 0 : index
    %23 = vector.load %arg3[%c0_13, %c0_14] : memref<179x90xf32, #tpu.memory_space<vmem>>, vector<179x90xf32>
    %cst_15 = arith.constant dense<0.000000e+00> : vector<62x90xf32>
    %24 = tpu.matmul %22, %23, %cst_15 {dimension_numbers = #tpu.dot_dimension_numbers<[1], [0], [0], [1], [0, 0, 1, 1], [], []>} : vector<62x179xf32>, vector<179x90xf32>, vector<62x90xf32> -> vector<62x90xf32>
    %25 = vector.extract_strided_slice %24 {offsets = [0, 0], sizes = [61, 90], strides = [1, 1]} : vector<62x90xf32> to vector<61x90xf32>
    %26 = vector.extract_strided_slice %24 {offsets = [1, 0], sizes = [61, 90], strides = [1, 1]} : vector<62x90xf32> to vector<61x90xf32>
    %27 = arith.maximumf %25, %26 : vector<61x90xf32>
    %c0_16 = arith.constant 0 : index
    %c0_17 = arith.constant 0 : index
    %28 = vector.load %arg4[%c0_16, %c0_17] : memref<30x61xf32, #tpu.memory_space<vmem>>, vector<30x61xf32>
    %cst_18 = arith.constant dense<0.000000e+00> : vector<30x90xf32>
    %29 = tpu.matmul %28, %27, %cst_18 {dimension_numbers = #tpu.dot_dimension_numbers<[1], [0], [0], [1], [0, 0, 1, 1], [], []>} : vector<30x61xf32>, vector<61x90xf32>, vector<30x90xf32> -> vector<30x90xf32>
    %c0_19 = arith.constant 0 : index
    %c0_20 = arith.constant 0 : index
    %30 = vector.load %arg5[%c0_19, %c0_20] : memref<90x150xf32, #tpu.memory_space<vmem>>, vector<90x150xf32>
    %cst_21 = arith.constant dense<0.000000e+00> : vector<30x150xf32>
    %31 = tpu.matmul %29, %30, %cst_21 {dimension_numbers = #tpu.dot_dimension_numbers<[1], [0], [0], [1], [0, 0, 1, 1], [], []>} : vector<30x90xf32>, vector<90x150xf32>, vector<30x150xf32> -> vector<30x150xf32>
    %c0_22 = arith.constant 0 : index
    %c0_23 = arith.constant 0 : index
    %32 = vector.load %arg7[%c0_22, %c0_23] : memref<2x30xf32, #tpu.memory_space<vmem>>, vector<2x30xf32>
    %c0_24 = arith.constant 0 : index
    %c0_25 = arith.constant 0 : index
    %33 = vector.load %arg6[%c0_24, %c0_25] : memref<30x150xf32, #tpu.memory_space<vmem>>, vector<30x150xf32>
    %34 = arith.mulf %31, %33 : vector<30x150xf32>
    %cst_26 = arith.constant dense<0.000000e+00> : vector<2x150xf32>
    %35 = tpu.matmul %32, %34, %cst_26 {dimension_numbers = #tpu.dot_dimension_numbers<[1], [0], [0], [1], [0, 0, 1, 1], [], []>} : vector<2x30xf32>, vector<30x150xf32>, vector<2x150xf32> -> vector<2x150xf32>
    %c0_27 = arith.constant 0 : index
    %c0_28 = arith.constant 0 : index
    %36 = vector.load %arg8[%c0_27, %c0_28] : memref<150x10xf32, #tpu.memory_space<vmem>>, vector<150x10xf32>
    %cst_29 = arith.constant dense<0.000000e+00> : vector<2x10xf32>
    %37 = tpu.matmul %35, %36, %cst_29 {dimension_numbers = #tpu.dot_dimension_numbers<[1], [0], [0], [1], [0, 0, 1, 1], [], []>} : vector<2x150xf32>, vector<150x10xf32>, vector<2x10xf32> -> vector<2x10xf32>
    %c0_30 = arith.constant 0 : index
    %c0_31 = arith.constant 0 : index
    %38 = vector.load %arg9[%c0_30, %c0_31] : memref<1x10xf32, #tpu.memory_space<vmem>>, vector<1x10xf32>
    %39 = vector.broadcast %38 : vector<1x10xf32> to vector<2x10xf32>
    %40 = arith.addf %37, %39 : vector<2x10xf32>
    %c0_32 = arith.constant 0 : index
    %c0_33 = arith.constant 0 : index
    %41 = vector.load %arg10[%c0_32, %c0_33] : memref<2x10xf32, #tpu.memory_space<vmem>>, vector<2x10xf32>
    tpu.vector_store %arg10[%c0_32, %c0_33], %40 {strides = array<i32>} : memref<2x10xf32, #tpu.memory_space<vmem>>, vector<2x10xf32>,
    return
  }
}

</mosaic_0001>

<llo_original>
// kernel: net_forward.1
$region0: #{net_forward.1}
  #allocation0 [shape = 'u32[]', space=smem, size = 0x4, offset = 0x4, fixed_abs, tag = 'smem constant byte address 0x4 - core index']
  #allocation1 [shape = 'u32[144,128]{1,0:T(1,128)}', space=vmem, size = 0x12000, scoped, tag = 'internal scratch']
  %s0 = inlined_call_operand.vmem [shape: f32[64,32], index: 0, kind: input, shape index: {}]
  %s1 = inlined_call_operand.vmem [shape: f32[3,32,180], index: 1, kind: input, shape index: {}]
  %s2 = inlined_call_operand.vmem [shape: f32[1,180], index: 2, kind: input, shape index: {}]
  %s3 = inlined_call_operand.vmem [shape: f32[179,90], index: 3, kind: input, shape index: {}]
  %s4 = inlined_call_operand.vmem [shape: f32[30,61], index: 4, kind: input, shape index: {}]
  %s5 = inlined_call_operand.vmem [shape: f32[90,150], index: 5, kind: input, shape index: {}]
  %s6 = inlined_call_operand.vmem [shape: f32[30,150], index: 6, kind: input, shape index: {}]
  %s7 = inlined_call_operand.vmem [shape: f32[2,30], index: 7, kind: input, shape index: {}]
  %s8 = inlined_call_operand.vmem [shape: f32[150,10], index: 8, kind: input, shape index: {}]
  %s9 = inlined_call_operand.vmem [shape: f32[1,10], index: 9, kind: input, shape index: {}]
  %s10 = inlined_call_operand.hbm [shape: f32[2,10], index: 10, kind: output, shape index: {}]
  %s11 = sld [smem:[#allocation0]]
  $region50: #{net_forward.1} parent=0
    _
  %s13 = ssub.s32 1, %s11
  %s14 = scalar_select 0, %s13, %s11
  $region1: #{net_forward.1} parent=0
    #allocation2 [shape = 'u8[1024]{0}', space=vmem, size = 0x400, scoped, tag = 'output window, operand 0, single buffered']
    #allocation3 [shape = 's32[1]{0}', space=sflag, size = 0x4, scoped, tag = 'scoped memory for net_forward.1']
    %15 = vsyncpa [#allocation3], 0
    // Predicated region
    $region2: #{net_forward.1} parent=1 // pred_check
      _
    $region3: #{net_forward.1} parent=1 // pred_check_branch
      %17 = sbr.rel (0) target = $region5
    $region4: #{net_forward.1} parent=1 // pred_region
      _
    $region5: #{net_forward.1} parent=1 // pred_fallthru
      _
    // Predicated region
    $region6: #{net_forward.1} parent=1 // pred_check
      _
    $region7: #{net_forward.1} parent=1 // pred_check_branch
      %19 = sbr.rel (0) target = $region9
    $region8: #{net_forward.1} parent=1 // pred_region
      _
    $region9: #{net_forward.1} parent=1 // pred_fallthru
      _
    // Predicated region
    $region10: #{net_forward.1} parent=1 // pred_check
      _
    $region11: #{net_forward.1} parent=1 // pred_check_branch
      %21 = sbr.rel (0) target = $region13
    $region12: #{net_forward.1} parent=1 // pred_region
      _
    $region13: #{net_forward.1} parent=1 // pred_fallthru
      _
    // Predicated region
    $region14: #{net_forward.1} parent=1 // pred_check
      _
    $region15: #{net_forward.1} parent=1 // pred_check_branch
      %23 = sbr.rel (0) target = $region17
    $region16: #{net_forward.1} parent=1 // pred_region
      _
    $region17: #{net_forward.1} parent=1 // pred_fallthru
      _
    // Predicated region
    $region18: #{net_forward.1} parent=1 // pred_check
      _
    $region19: #{net_forward.1} parent=1 // pred_check_branch
      %25 = sbr.rel (0) target = $region21
    $region20: #{net_forward.1} parent=1 // pred_region
      _
    $region21: #{net_forward.1} parent=1 // pred_fallthru
      _
    // Predicated region
    $region22: #{net_forward.1} parent=1 // pred_check
      _
    $region23: #{net_forward.1} parent=1 // pred_check_branch
      %27 = sbr.rel (0) target = $region25
    $region24: #{net_forward.1} parent=1 // pred_region
      _
    $region25: #{net_forward.1} parent=1 // pred_fallthru
      _
    // Predicated region
    $region26: #{net_forward.1} parent=1 // pred_check
      _
    $region27: #{net_forward.1} parent=1 // pred_check_branch
      %29 = sbr.rel (0) target = $region29
    $region28: #{net_forward.1} parent=1 // pred_region
      _
    $region29: #{net_forward.1} parent=1 // pred_fallthru
      _
    // Predicated region
    $region30: #{net_forward.1} parent=1 // pred_check
      _
    $region31: #{net_forward.1} parent=1 // pred_check_branch
      %31 = sbr.rel (0) target = $region33
    $region32: #{net_forward.1} parent=1 // pred_region
      _
    $region33: #{net_forward.1} parent=1 // pred_fallthru
      _
    // Predicated region
    $region34: #{net_forward.1} parent=1 // pred_check
      _
    $region35: #{net_forward.1} parent=1 // pred_check_branch
      %33 = sbr.rel (0) target = $region37
    $region36: #{net_forward.1} parent=1 // pred_region
      _
    $region37: #{net_forward.1} parent=1 // pred_fallthru
      _
    // Predicated region
    $region38: #{net_forward.1} parent=1 // pred_check
      _
    $region39: #{net_forward.1} parent=1 // pred_check_branch
      %35 = sbr.rel (0) target = $region41
    $region40: #{net_forward.1} parent=1 // pred_region
      _
    $region41: #{net_forward.1} parent=1 // pred_fallthru
      _
    %v36 = vld [vmem:[%s0] sm:$0xff]
    %v37 = vld [vmem:[%s0 + $0x8] sm:$0xff]
    %v38 = vld [vmem:[%s0 + $0x10] sm:$0xff]
    %v39 = vld [vmem:[%s0 + $0x18] sm:$0xff]
    %v40 = vld [vmem:[%s0 + $0x20] sm:$0xff]
    %v41 = vld [vmem:[%s0 + $0x28] sm:$0xff]
    %v42 = vld [vmem:[%s0 + $0x30] sm:$0xff]
    %v43 = vld [vmem:[%s0 + $0x38] sm:$0xff]
    %v44 = vld [vmem:[%s1] sm:$0xff]
    %v45 = vld [vmem:[%s1 + $0x8] sm:$0xff]
    %v46 = vld [vmem:[%s1 + $0x10] sm:$0xff]
    %v47 = vld [vmem:[%s1 + $0x18] sm:$0xff]
    %v48 = vld [vmem:[%s1 + $0x20] sm:$0xff]
    %v49 = vld [vmem:[%s1 + $0x28] sm:$0xff]
    %v50 = vld [vmem:[%s1 + $0x30] sm:$0xff]
    %v51 = vld [vmem:[%s1 + $0x38] sm:$0xff]
    %s52 = scalar_lea.vmem %s1, 64
    %v53 = vld [vmem:[%s52] sm:$0xff]
    %v54 = vld [vmem:[%s52 + $0x8] sm:$0xff]
    %v55 = vld [vmem:[%s52 + $0x10] sm:$0xff]
    %v56 = vld [vmem:[%s52 + $0x18] sm:$0xff]
    %v57 = vld [vmem:[%s52 + $0x20] sm:$0xff]
    %v58 = vld [vmem:[%s52 + $0x28] sm:$0xff]
    %v59 = vld [vmem:[%s52 + $0x30] sm:$0xff]
    %v60 = vld [vmem:[%s52 + $0x38] sm:$0xff]
    %vm69 = vcmask 1046528
    %v70 = vrot.slane %v36, 1
    %v71 = vrot.slane %v37, 1
    %v72 = vsel %vm69, %v70, %v71
    %v73 = vrot.slane %v38, 1
    %v74 = vsel %vm69, %v71, %v73
    %v75 = vrot.slane %v39, 1
    %v76 = vsel %vm69, %v73, %v75
    %v77 = vrot.slane %v40, 1
    %v78 = vsel %vm69, %v75, %v77
    %v79 = vrot.slane %v41, 1
    %v80 = vsel %vm69, %v77, %v79
    %v81 = vrot.slane %v42, 1
    %v82 = vsel %vm69, %v79, %v81
    %v83 = vrot.slane %v43, 1
    %v84 = vsel %vm69, %v81, %v83
    %vm85 = vcmask 261120
    %v86 = vsel %vm85, %v72, 0
    %v88 = vsel %vm85, %v74, 0
    %v90 = vsel %vm85, %v76, 0
    %v92 = vsel %vm85, %v78, 0
    %v94 = vsel %vm85, %v80, 0
    %v96 = vsel %vm85, %v82, 0
    %v98 = vsel %vm85, %v84, 0
    %v100 = vsel %vm85, %v83, 0
    %102 = vmatprep.subr.mxu0 0.0
    %103 = vmatpush1.msra.mxu0 0.0
    %104 = vmatprep.subr.mxu0 0.0
    %105 = vmatpush1.msra.mxu0 0.0
    %106 = vmatprep.subr.mxu0 0.0
    %107 = vmatpush1.msra.mxu0 0.0
    %108 = vmatprep.subr.mxu0 0.0
    %109 = vmatpush1.msra.mxu0 0.0
    %110 = vmatprep.subr.mxu0 0.0
    %111 = vmatpush1.msra.mxu0 0.0
    %112 = vmatprep.subr.mxu0 0.0
    %113 = vmatpush1.msra.mxu0 0.0
    %114 = vmatprep.subr.mxu0 0.0
    %115 = vmatpush1.msra.mxu0 0.0
    %116 = vmatprep.subr.mxu0 0.0
    %117 = vmatpush1.msra.mxu0 0.0
    %118 = vmatprep.subr.mxu0 0.0
    %119 = vmatpush1.msra.mxu0 0.0
    %120 = vmatprep.subr.mxu0 0.0
    %121 = vmatpush1.msra.mxu0 0.0
    %122 = vmatprep.subr.mxu0 0.0
    %123 = vmatpush1.msra.mxu0 0.0
    %124 = vmatprep.subr.mxu0 0.0
    %125 = vmatpush1.msra.mxu0 0.0
    %126 = vmatprep.subr.mxu0 %v60
    %127 = vmatpush1.msra.mxu0 %v59
    %128 = vmatprep.subr.mxu0 %v58
    %129 = vmatpush1.msra.mxu0 %v57
    %130 = vmatprep.subr.mxu0 %v56
    %131 = vmatpush1.msra.mxu0 %v55
    %132 = vmatprep.subr.mxu0 %v54
    %133 = vmatpush1.msra.mxu0 %v53
    %134 = vmatprep.subr.mxu0 0.0
    %135 = vmatpush2.msra.mxu0 0.0
    %136 = vmatprep.subr.mxu0 0.0
    %137 = vmatpush2.msra.mxu0 0.0
    %138 = vmatprep.subr.mxu0 0.0
    %139 = vmatpush2.msra.mxu0 0.0
    %140 = vmatprep.subr.mxu0 0.0
    %141 = vmatpush2.msra.mxu0 0.0
    %142 = vmatprep.subr.mxu0 0.0
    %143 = vmatpush2.msra.mxu0 0.0
    %144 = vmatprep.subr.mxu0 0.0
    %145 = vmatpush2.msra.mxu0 0.0
    %146 = vmatprep.subr.mxu0 0.0
    %147 = vmatpush2.msra.mxu0 0.0
    %148 = vmatprep.subr.mxu0 0.0
    %149 = vmatpush2.msra.mxu0 0.0
    %150 = vmatprep.subr.mxu0 0.0
    %151 = vmatpush2.msra.mxu0 0.0
    %152 = vmatprep.subr.mxu0 0.0
    %153 = vmatpush2.msra.mxu0 0.0
    %154 = vmatprep.subr.mxu0 0.0
    %155 = vmatpush2.msra.mxu0 0.0
    %156 = vmatprep.subr.mxu0 0.0
    %157 = vmatpush2.msra.mxu0 0.0
    %158 = vmatprep.subr.mxu0 0.0
    %159 = vmatpush2.msra.mxu0 0.0
    %160 = vmatprep.subr.mxu0 0.0
    %161 = vmatpush2.msra.mxu0 0.0
    %162 = vmatprep.subr.mxu0 0.0
    %163 = vmatpush2.msra.mxu0 0.0
    %164 = vmatprep.subr.mxu0 0.0
    %165 = vmatpush2.msra.mxu0 0.0
    %166 = vmatprep.mubr.f32.mxu0 0.0
    %167 = vmatmul.mubr.f32.gmra.mxu0 %v86
    %v168 = vpop.f32.mrf.mxu0
    %v169 = vadd.f32 0.0, %v168
    %v170 = vpop.f32.mrf.mxu0
    %v171 = vadd.f32 0.0, %v170
    %172 = vmatprep.mubr.f32.mxu0 0.0
    %173 = vmatmul.mubr.f32.gmra.mxu0 %v88
    %v174 = vpop.f32.mrf.mxu0
    %v175 = vadd.f32 0.0, %v174
    %v176 = vpop.f32.mrf.mxu0
    %v177 = vadd.f32 0.0, %v176
    %178 = vmatprep.mubr.f32.mxu0 0.0
    %179 = vmatmul.mubr.f32.gmra.mxu0 %v90
    %v180 = vpop.f32.mrf.mxu0
    %v181 = vadd.f32 0.0, %v180
    %v182 = vpop.f32.mrf.mxu0
    %v183 = vadd.f32 0.0, %v182
    %184 = vmatprep.mubr.f32.mxu0 0.0
    %185 = vmatmul.mubr.f32.gmra.mxu0 %v92
    %v186 = vpop.f32.mrf.mxu0
    %v187 = vadd.f32 0.0, %v186
    %v188 = vpop.f32.mrf.mxu0
    %v189 = vadd.f32 0.0, %v188
    %190 = vmatprep.mubr.f32.mxu0 0.0
    %191 = vmatmul.mubr.f32.gmra.mxu0 %v94
    %v192 = vpop.f32.mrf.mxu0
    %v193 = vadd.f32 0.0, %v192
    %v194 = vpop.f32.mrf.mxu0
    %v195 = vadd.f32 0.0, %v194
    %196 = vmatprep.mubr.f32.mxu0 0.0
    %197 = vmatmul.mubr.f32.gmra.mxu0 %v96
    %v198 = vpop.f32.mrf.mxu0
    %v199 = vadd.f32 0.0, %v198
    %v200 = vpop.f32.mrf.mxu0
    %v201 = vadd.f32 0.0, %v200
    %202 = vmatprep.mubr.f32.mxu0 0.0
    %203 = vmatmul.mubr.f32.gmra.mxu0 %v98
    %v204 = vpop.f32.mrf.mxu0
    %v205 = vadd.f32 0.0, %v204
    %v206 = vpop.f32.mrf.mxu0
    %v207 = vadd.f32 0.0, %v206
    %208 = vmatprep.mubr.f32.mxu0 0.0
    %209 = vmatmul.mubr.f32.gmra.mxu0 %v100
    %v210 = vpop.f32.mrf.mxu0
    %v211 = vadd.f32 0.0, %v210
    %v212 = vpop.f32.mrf.mxu0
    %v213 = vadd.f32 0.0, %v212
    %214 = vdwg.mxu0
    %v215 = vsel %vm85, %v36, 0
    %v217 = vsel %vm85, %v37, 0
    %v219 = vsel %vm85, %v38, 0
    %v221 = vsel %vm85, %v39, 0
    %v223 = vsel %vm85, %v40, 0
    %v225 = vsel %vm85, %v41, 0
    %v227 = vsel %vm85, %v42, 0
    %v229 = vsel %vm85, %v43, 0
    %231 = vmatprep.subr.mxu0 0.0
    %232 = vmatpush1.msra.mxu0 0.0
    %233 = vmatprep.subr.mxu0 0.0
    %234 = vmatpush1.msra.mxu0 0.0
    %235 = vmatprep.subr.mxu0 0.0
    %236 = vmatpush1.msra.mxu0 0.0
    %237 = vmatprep.subr.mxu0 0.0
    %238 = vmatpush1.msra.mxu0 0.0
    %239 = vmatprep.subr.mxu0 0.0
    %240 = vmatpush1.msra.mxu0 0.0
    %241 = vmatprep.subr.mxu0 0.0
    %242 = vmatpush1.msra.mxu0 0.0
    %243 = vmatprep.subr.mxu0 0.0
    %244 = vmatpush1.msra.mxu0 0.0
    %245 = vmatprep.subr.mxu0 0.0
    %246 = vmatpush1.msra.mxu0 0.0
    %247 = vmatprep.subr.mxu0 0.0
    %248 = vmatpush1.msra.mxu0 0.0
    %249 = vmatprep.subr.mxu0 0.0
    %250 = vmatpush1.msra.mxu0 0.0
    %251 = vmatprep.subr.mxu0 0.0
    %252 = vmatpush1.msra.mxu0 0.0
    %253 = vmatprep.subr.mxu0 0.0
    %254 = vmatpush1.msra.mxu0 0.0
    %255 = vmatprep.subr.mxu0 %v51
    %256 = vmatpush1.msra.mxu0 %v50
    %257 = vmatprep.subr.mxu0 %v49
    %258 = vmatpush1.msra.mxu0 %v48
    %259 = vmatprep.subr.mxu0 %v47
    %260 = vmatpush1.msra.mxu0 %v46
    %261 = vmatprep.subr.mxu0 %v45
    %262 = vmatpush1.msra.mxu0 %v44
    %263 = vmatprep.subr.mxu0 0.0
    %264 = vmatpush2.msra.mxu0 0.0
    %265 = vmatprep.subr.mxu0 0.0
    %266 = vmatpush2.msra.mxu0 0.0
    %267 = vmatprep.subr.mxu0 0.0
    %268 = vmatpush2.msra.mxu0 0.0
    %269 = vmatprep.subr.mxu0 0.0
    %270 = vmatpush2.msra.mxu0 0.0
    %271 = vmatprep.subr.mxu0 0.0
    %272 = vmatpush2.msra.mxu0 0.0
    %273 = vmatprep.subr.mxu0 0.0
    %274 = vmatpush2.msra.mxu0 0.0
    %275 = vmatprep.subr.mxu0 0.0
    %276 = vmatpush2.msra.mxu0 0.0
    %277 = vmatprep.subr.mxu0 0.0
    %278 = vmatpush2.msra.mxu0 0.0
    %279 = vmatprep.subr.mxu0 0.0
    %280 = vmatpush2.msra.mxu0 0.0
    %281 = vmatprep.subr.mxu0 0.0
    %282 = vmatpush2.msra.mxu0 0.0
    %283 = vmatprep.subr.mxu0 0.0
    %284 = vmatpush2.msra.mxu0 0.0
    %285 = vmatprep.subr.mxu0 0.0
    %286 = vmatpush2.msra.mxu0 0.0
    %287 = vmatprep.subr.mxu0 0.0
    %288 = vmatpush2.msra.mxu0 0.0
    %289 = vmatprep.subr.mxu0 0.0
    %290 = vmatpush2.msra.mxu0 0.0
    %291 = vmatprep.subr.mxu0 0.0
    %292 = vmatpush2.msra.mxu0 0.0
    %293 = vmatprep.subr.mxu0 0.0
    %294 = vmatpush2.msra.mxu0 0.0
    %295 = vmatprep.mubr.f32.mxu0 0.0
    %296 = vmatmul.mubr.f32.gmra.mxu0 %v215
    %v297 = vpop.f32.mrf.mxu0
    %v298 = vadd.f32 %v169, %v297
    %v299 = vpop.f32.mrf.mxu0
    %v300 = vadd.f32 %v171, %v299
    %301 = vmatprep.mubr.f32.mxu0 0.0
    %302 = vmatmul.mubr.f32.gmra.mxu0 %v217
    %v303 = vpop.f32.mrf.mxu0
    %v304 = vadd.f32 %v175, %v303
    %v305 = vpop.f32.mrf.mxu0
    %v306 = vadd.f32 %v177, %v305
    %307 = vmatprep.mubr.f32.mxu0 0.0
    %308 = vmatmul.mubr.f32.gmra.mxu0 %v219
    %v309 = vpop.f32.mrf.mxu0
    %v310 = vadd.f32 %v181, %v309
    %v311 = vpop.f32.mrf.mxu0
    %v312 = vadd.f32 %v183, %v311
    %313 = vmatprep.mubr.f32.mxu0 0.0
    %314 = vmatmul.mubr.f32.gmra.mxu0 %v221
    %v315 = vpop.f32.mrf.mxu0
    %v316 = vadd.f32 %v187, %v315
    %v317 = vpop.f32.mrf.mxu0
    %v318 = vadd.f32 %v189, %v317
    %319 = vmatprep.mubr.f32.mxu0 0.0
    %320 = vmatmul.mubr.f32.gmra.mxu0 %v223
    %v321 = vpop.f32.mrf.mxu0
    %v322 = vadd.f32 %v193, %v321
    %v323 = vpop.f32.mrf.mxu0
    %v324 = vadd.f32 %v195, %v323
    %325 = vmatprep.mubr.f32.mxu0 0.0
    %326 = vmatmul.mubr.f32.gmra.mxu0 %v225
    %v327 = vpop.f32.mrf.mxu0
    %v328 = vadd.f32 %v199, %v327
    %v329 = vpop.f32.mrf.mxu0
    %v330 = vadd.f32 %v201, %v329
    %331 = vmatprep.mubr.f32.mxu0 0.0
    %332 = vmatmul.mubr.f32.gmra.mxu0 %v227
    %v333 = vpop.f32.mrf.mxu0
    %v334 = vadd.f32 %v205, %v333
    %v335 = vpop.f32.mrf.mxu0
    %v336 = vadd.f32 %v207, %v335
    %337 = vmatprep.mubr.f32.mxu0 0.0
    %338 = vmatmul.mubr.f32.gmra.mxu0 %v229
    %v339 = vpop.f32.mrf.mxu0
    %v340 = vadd.f32 %v211, %v339
    %v341 = vpop.f32.mrf.mxu0
    %v342 = vadd.f32 %v213, %v341
    %343 = vdwg.mxu0
    %s344 = scalar_lea.vmem %s1, 128
    %v345 = vld [vmem:[%s344] sm:$0xff]
    %v346 = vld [vmem:[%s344 + $0x8] sm:$0xff]
    %v347 = vld [vmem:[%s344 + $0x10] sm:$0xff]
    %v348 = vld [vmem:[%s344 + $0x18] sm:$0xff]
    %v349 = vld [vmem:[%s344 + $0x20] sm:$0xff]
    %v350 = vld [vmem:[%s344 + $0x28] sm:$0xff]
    %v351 = vld [vmem:[%s344 + $0x30] sm:$0xff]
    %v352 = vld [vmem:[%s344 + $0x38] sm:$0xff]
    %vm353 = vcmask 1045504
    %v354 = vrot.slane %v36, 2
    %v355 = vrot.slane %v37, 2
    %v356 = vsel %vm353, %v354, %v355
    %v357 = vrot.slane %v38, 2
    %v358 = vsel %vm353, %v355, %v357
    %v359 = vrot.slane %v39, 2
    %v360 = vsel %vm353, %v357, %v359
    %v361 = vrot.slane %v40, 2
    %v362 = vsel %vm353, %v359, %v361
    %v363 = vrot.slane %v41, 2
    %v364 = vsel %vm353, %v361, %v363
    %v365 = vrot.slane %v42, 2
    %v366 = vsel %vm353, %v363, %v365
    %v367 = vrot.slane %v43, 2
    %v368 = vsel %vm353, %v365, %v367
    %v369 = vsel %vm85, %v356, 0
    %v371 = vsel %vm85, %v358, 0
    %v373 = vsel %vm85, %v360, 0
    %v375 = vsel %vm85, %v362, 0
    %v377 = vsel %vm85, %v364, 0
    %v379 = vsel %vm85, %v366, 0
    %v381 = vsel %vm85, %v368, 0
    %v383 = vsel %vm85, %v367, 0
    %385 = vmatprep.subr.mxu0 0.0
    %386 = vmatpush1.msra.mxu0 0.0
    %387 = vmatprep.subr.mxu0 0.0
    %388 = vmatpush1.msra.mxu0 0.0
    %389 = vmatprep.subr.mxu0 0.0
    %390 = vmatpush1.msra.mxu0 0.0
    %391 = vmatprep.subr.mxu0 0.0
    %392 = vmatpush1.msra.mxu0 0.0
    %393 = vmatprep.subr.mxu0 0.0
    %394 = vmatpush1.msra.mxu0 0.0
    %395 = vmatprep.subr.mxu0 0.0
    %396 = vmatpush1.msra.mxu0 0.0
    %397 = vmatprep.subr.mxu0 0.0
    %398 = vmatpush1.msra.mxu0 0.0
    %399 = vmatprep.subr.mxu0 0.0
    %400 = vmatpush1.msra.mxu0 0.0
    %401 = vmatprep.subr.mxu0 0.0
    %402 = vmatpush1.msra.mxu0 0.0
    %403 = vmatprep.subr.mxu0 0.0
    %404 = vmatpush1.msra.mxu0 0.0
    %405 = vmatprep.subr.mxu0 0.0
    %406 = vmatpush1.msra.mxu0 0.0
    %407 = vmatprep.subr.mxu0 0.0
    %408 = vmatpush1.msra.mxu0 0.0
    %409 = vmatprep.subr.mxu0 %v352
    %410 = vmatpush1.msra.mxu0 %v351
    %411 = vmatprep.subr.mxu0 %v350
    %412 = vmatpush1.msra.mxu0 %v349
    %413 = vmatprep.subr.mxu0 %v348
    %414 = vmatpush1.msra.mxu0 %v347
    %415 = vmatprep.subr.mxu0 %v346
    %416 = vmatpush1.msra.mxu0 %v345
    %417 = vmatprep.subr.mxu0 0.0
    %418 = vmatpush2.msra.mxu0 0.0
    %419 = vmatprep.subr.mxu0 0.0
    %420 = vmatpush2.msra.mxu0 0.0
    %421 = vmatprep.subr.mxu0 0.0
    %422 = vmatpush2.msra.mxu0 0.0
    %423 = vmatprep.subr.mxu0 0.0
    %424 = vmatpush2.msra.mxu0 0.0
    %425 = vmatprep.subr.mxu0 0.0
    %426 = vmatpush2.msra.mxu0 0.0
    %427 = vmatprep.subr.mxu0 0.0
    %428 = vmatpush2.msra.mxu0 0.0
    %429 = vmatprep.subr.mxu0 0.0
    %430 = vmatpush2.msra.mxu0 0.0
    %431 = vmatprep.subr.mxu0 0.0
    %432 = vmatpush2.msra.mxu0 0.0
    %433 = vmatprep.subr.mxu0 0.0
    %434 = vmatpush2.msra.mxu0 0.0
    %435 = vmatprep.subr.mxu0 0.0
    %436 = vmatpush2.msra.mxu0 0.0
    %437 = vmatprep.subr.mxu0 0.0
    %438 = vmatpush2.msra.mxu0 0.0
    %439 = vmatprep.subr.mxu0 0.0
    %440 = vmatpush2.msra.mxu0 0.0
    %441 = vmatprep.subr.mxu0 0.0
    %442 = vmatpush2.msra.mxu0 0.0
    %443 = vmatprep.subr.mxu0 0.0
    %444 = vmatpush2.msra.mxu0 0.0
    %445 = vmatprep.subr.mxu0 0.0
    %446 = vmatpush2.msra.mxu0 0.0
    %447 = vmatprep.subr.mxu0 0.0
    %448 = vmatpush2.msra.mxu0 0.0
    %449 = vmatprep.mubr.f32.mxu0 0.0
    %450 = vmatmul.mubr.f32.gmra.mxu0 %v369
    %v451 = vpop.f32.mrf.mxu0
    %v452 = vadd.f32 0.0, %v451
    %v453 = vpop.f32.mrf.mxu0
    %v454 = vadd.f32 0.0, %v453
    %455 = vmatprep.mubr.f32.mxu0 0.0
    %456 = vmatmul.mubr.f32.gmra.mxu0 %v371
    %v457 = vpop.f32.mrf.mxu0
    %v458 = vadd.f32 0.0, %v457
    %v459 = vpop.f32.mrf.mxu0
    %v460 = vadd.f32 0.0, %v459
    %461 = vmatprep.mubr.f32.mxu0 0.0
    %462 = vmatmul.mubr.f32.gmra.mxu0 %v373
    %v463 = vpop.f32.mrf.mxu0
    %v464 = vadd.f32 0.0, %v463
    %v465 = vpop.f32.mrf.mxu0
    %v466 = vadd.f32 0.0, %v465
    %467 = vmatprep.mubr.f32.mxu0 0.0
    %468 = vmatmul.mubr.f32.gmra.mxu0 %v375
    %v469 = vpop.f32.mrf.mxu0
    %v470 = vadd.f32 0.0, %v469
    %v471 = vpop.f32.mrf.mxu0
    %v472 = vadd.f32 0.0, %v471
    %473 = vmatprep.mubr.f32.mxu0 0.0
    %474 = vmatmul.mubr.f32.gmra.mxu0 %v377
    %v475 = vpop.f32.mrf.mxu0
    %v476 = vadd.f32 0.0, %v475
    %v477 = vpop.f32.mrf.mxu0
    %v478 = vadd.f32 0.0, %v477
    %479 = vmatprep.mubr.f32.mxu0 0.0
    %480 = vmatmul.mubr.f32.gmra.mxu0 %v379
    %v481 = vpop.f32.mrf.mxu0
    %v482 = vadd.f32 0.0, %v481
    %v483 = vpop.f32.mrf.mxu0
    %v484 = vadd.f32 0.0, %v483
    %485 = vmatprep.mubr.f32.mxu0 0.0
    %486 = vmatmul.mubr.f32.gmra.mxu0 %v381
    %v487 = vpop.f32.mrf.mxu0
    %v488 = vadd.f32 0.0, %v487
    %v489 = vpop.f32.mrf.mxu0
    %v490 = vadd.f32 0.0, %v489
    %491 = vmatprep.mubr.f32.mxu0 0.0
    %492 = vmatmul.mubr.f32.gmra.mxu0 %v383
    %v493 = vpop.f32.mrf.mxu0
    %v494 = vadd.f32 0.0, %v493
    %v495 = vpop.f32.mrf.mxu0
    %v496 = vadd.f32 0.0, %v495
    %497 = vdwg.mxu0
    %v498 = vadd.f32 %v298, %v452
    %v499 = vadd.f32 %v300, %v454
    %v500 = vadd.f32 %v304, %v458
    %v501 = vadd.f32 %v306, %v460
    %v502 = vadd.f32 %v310, %v464
    %v503 = vadd.f32 %v312, %v466
    %v504 = vadd.f32 %v316, %v470
    %v505 = vadd.f32 %v318, %v472
    %v506 = vadd.f32 %v322, %v476
    %v507 = vadd.f32 %v324, %v478
    %v508 = vadd.f32 %v328, %v482
    %v509 = vadd.f32 %v330, %v484
    %v510 = vadd.f32 %v334, %v488
    %v511 = vadd.f32 %v336, %v490
    %v512 = vadd.f32 %v340, %v494
    %v513 = vadd.f32 %v342, %v496
    %v514 = vld [vmem:[%s2] sm:$0x3]
    %v516 = vlaneseq
    %v517 = vshrl.u32 %v516, 7
    %v518 = vsub.s32 0, %v517
    %v519 = vrot.slane %v514, %v518
    %v520 = vlaneseq
    %v521 = vshrl.u32 %v520, 7
    %v522 = vsub.s32 1, %v521
    %v523 = vrot.slane %v514, %v522
    %v526 = vadd.f32 %v498, %v519
    %v527 = vadd.f32 %v499, %v523
    %v528 = vadd.f32 %v500, %v519
    %v529 = vadd.f32 %v501, %v523
    %v530 = vadd.f32 %v502, %v519
    %v531 = vadd.f32 %v503, %v523
    %v532 = vadd.f32 %v504, %v519
    %v533 = vadd.f32 %v505, %v523
    %v534 = vadd.f32 %v506, %v519
    %v535 = vadd.f32 %v507, %v523
    %v536 = vadd.f32 %v508, %v519
    %v537 = vadd.f32 %v509, %v523
    %v538 = vadd.f32 %v510, %v519
    %v539 = vadd.f32 %v511, %v523
    %v540 = vadd.f32 %v512, %v519
    %v541 = vadd.f32 %v513, %v523
    %v542 = vmax.f32 %v526, 0.0
    %v543 = vmax.f32 %v527, 0.0
    %v544 = vmax.f32 %v528, 0.0
    %v545 = vmax.f32 %v529, 0.0
    %v546 = vmax.f32 %v530, 0.0
    %v547 = vmax.f32 %v531, 0.0
    %v548 = vmax.f32 %v532, 0.0
    %v549 = vmax.f32 %v533, 0.0
    %v550 = vmax.f32 %v534, 0.0
    %v551 = vmax.f32 %v535, 0.0
    %v552 = vmax.f32 %v536, 0.0
    %v553 = vmax.f32 %v537, 0.0
    %v554 = vmax.f32 %v538, 0.0
    %v555 = vmax.f32 %v539, 0.0
    %v556 = vmax.f32 %v540, 0.0
    %v557 = vmax.f32 %v541, 0.0
    %574 = vrot.lane.b32.xlu0 %v542, 127
    %v575 = vpop.permute.xlu0 %574
    %576 = vrot.lane.b32.xlu0 %v543, 127
    %v577 = vpop.permute.xlu0 %576
    %578 = vrot.lane.b32.xlu0 %v544, 127
    %v579 = vpop.permute.xlu0 %578
    %580 = vrot.lane.b32.xlu0 %v545, 127
    %v581 = vpop.permute.xlu0 %580
    %582 = vrot.lane.b32.xlu0 %v546, 127
    %v583 = vpop.permute.xlu0 %582
    %584 = vrot.lane.b32.xlu0 %v547, 127
    %v585 = vpop.permute.xlu0 %584
    %586 = vrot.lane.b32.xlu0 %v548, 127
    %v587 = vpop.permute.xlu0 %586
    %588 = vrot.lane.b32.xlu0 %v549, 127
    %v589 = vpop.permute.xlu0 %588
    %590 = vrot.lane.b32.xlu0 %v550, 127
    %v591 = vpop.permute.xlu0 %590
    %592 = vrot.lane.b32.xlu0 %v551, 127
    %v593 = vpop.permute.xlu0 %592
    %594 = vrot.lane.b32.xlu0 %v552, 127
    %v595 = vpop.permute.xlu0 %594
    %596 = vrot.lane.b32.xlu0 %v553, 127
    %v597 = vpop.permute.xlu0 %596
    %598 = vrot.lane.b32.xlu0 %v554, 127
    %v599 = vpop.permute.xlu0 %598
    %600 = vrot.lane.b32.xlu0 %v555, 127
    %v601 = vpop.permute.xlu0 %600
    %602 = vrot.lane.b32.xlu0 %v556, 127
    %v603 = vpop.permute.xlu0 %602
    %604 = vrot.lane.b32.xlu0 %v557, 127
    %v605 = vpop.permute.xlu0 %604
    %vm606 = vcmask 1039360
    %v607 = vsel %vm606, %v575, %v577
    %v608 = vsel %vm606, %v579, %v581
    %v609 = vsel %vm606, %v583, %v585
    %v610 = vsel %vm606, %v587, %v589
    %v611 = vsel %vm606, %v591, %v593
    %v612 = vsel %vm606, %v595, %v597
    %v613 = vsel %vm606, %v599, %v601
    %v614 = vsel %vm606, %v603, %v605
    %v631 = vmax.f32 %v542, %v607
    %v632 = vmax.f32 %v543, %v577
    %v633 = vmax.f32 %v544, %v608
    %v634 = vmax.f32 %v545, %v581
    %v635 = vmax.f32 %v546, %v609
    %v636 = vmax.f32 %v547, %v585
    %v637 = vmax.f32 %v548, %v610
    %v638 = vmax.f32 %v549, %v589
    %v639 = vmax.f32 %v550, %v611
    %v640 = vmax.f32 %v551, %v593
    %v641 = vmax.f32 %v552, %v612
    %v642 = vmax.f32 %v553, %v597
    %v643 = vmax.f32 %v554, %v613
    %v644 = vmax.f32 %v555, %v601
    %v645 = vmax.f32 %v556, %v614
    %v646 = vmax.f32 %v557, %v605
    %v647 = vld [vmem:[%s3] sm:$0xff]
    %v648 = vld [vmem:[%s3 + $0x8] sm:$0xff]
    %v649 = vld [vmem:[%s3 + $0x10] sm:$0xff]
    %v650 = vld [vmem:[%s3 + $0x18] sm:$0xff]
    %v651 = vld [vmem:[%s3 + $0x20] sm:$0xff]
    %v652 = vld [vmem:[%s3 + $0x28] sm:$0xff]
    %v653 = vld [vmem:[%s3 + $0x30] sm:$0xff]
    %v654 = vld [vmem:[%s3 + $0x38] sm:$0xff]
    %v655 = vld [vmem:[%s3 + $0x40] sm:$0xff]
    %v656 = vld [vmem:[%s3 + $0x48] sm:$0xff]
    %v657 = vld [vmem:[%s3 + $0x50] sm:$0xff]
    %v658 = vld [vmem:[%s3 + $0x58] sm:$0xff]
    %v659 = vld [vmem:[%s3 + $0x60] sm:$0xff]
    %v660 = vld [vmem:[%s3 + $0x68] sm:$0xff]
    %v661 = vld [vmem:[%s3 + $0x70] sm:$0xff]
    %v662 = vld [vmem:[%s3 + $0x78] sm:$0xff]
    %v663 = vld [vmem:[%s3 + $0x80] sm:$0xff]
    %v664 = vld [vmem:[%s3 + $0x88] sm:$0xff]
    %v665 = vld [vmem:[%s3 + $0x90] sm:$0xff]
    %v666 = vld [vmem:[%s3 + $0x98] sm:$0xff]
    %v667 = vld [vmem:[%s3 + $0xa0] sm:$0xff]
    %v668 = vld [vmem:[%s3 + $0xa8] sm:$0xff]
    %v669 = vld [vmem:[%s3 + $0xb0] sm:$0x7]
    %vm670 = vcmask 416768
    %v672 = vsel %vm670, %v632, 0
    %v675 = vsel %vm670, %v634, 0
    %v678 = vsel %vm670, %v636, 0
    %v681 = vsel %vm670, %v638, 0
    %v684 = vsel %vm670, %v640, 0
    %v687 = vsel %vm670, %v642, 0
    %v690 = vsel %vm670, %v644, 0
    %v693 = vsel %vm670, %v646, 0
    %vm695 = vcmask 1042432
    %v697 = vsel %vm695, %v669, 0
    %699 = vmatprep.subr.mxu0 0.0
    %700 = vmatpush1.msra.mxu0 %v662
    %701 = vmatprep.subr.mxu0 0.0
    %702 = vmatpush1.msra.mxu0 %v661
    %703 = vmatprep.subr.mxu0 0.0
    %704 = vmatpush1.msra.mxu0 %v660
    %705 = vmatprep.subr.mxu0 0.0
    %706 = vmatpush1.msra.mxu0 %v659
    %707 = vmatprep.subr.mxu0 0.0
    %708 = vmatpush1.msra.mxu0 %v658
    %709 = vmatprep.subr.mxu0 0.0
    %710 = vmatpush1.msra.mxu0 %v657
    %711 = vmatprep.subr.mxu0 0.0
    %712 = vmatpush1.msra.mxu0 %v656
    %713 = vmatprep.subr.mxu0 0.0
    %714 = vmatpush1.msra.mxu0 %v655
    %715 = vmatprep.subr.mxu0 0.0
    %716 = vmatpush1.msra.mxu0 %v654
    %717 = vmatprep.subr.mxu0 0.0
    %718 = vmatpush1.msra.mxu0 %v653
    %719 = vmatprep.subr.mxu0 0.0
    %720 = vmatpush1.msra.mxu0 %v652
    %721 = vmatprep.subr.mxu0 0.0
    %722 = vmatpush1.msra.mxu0 %v651
    %723 = vmatprep.subr.mxu0 0.0
    %724 = vmatpush1.msra.mxu0 %v650
    %725 = vmatprep.subr.mxu0 0.0
    %726 = vmatpush1.msra.mxu0 %v649
    %727 = vmatprep.subr.mxu0 0.0
    %728 = vmatpush1.msra.mxu0 %v648
    %729 = vmatprep.subr.mxu0 0.0
    %730 = vmatpush1.msra.mxu0 %v647
    %731 = vmatprep.subr.mxu0 0.0
    %732 = vmatpush2.msra.mxu0 0.0
    %733 = vmatprep.subr.mxu0 0.0
    %734 = vmatpush2.msra.mxu0 0.0
    %735 = vmatprep.subr.mxu0 0.0
    %736 = vmatpush2.msra.mxu0 0.0
    %737 = vmatprep.subr.mxu0 0.0
    %738 = vmatpush2.msra.mxu0 0.0
    %739 = vmatprep.subr.mxu0 0.0
    %740 = vmatpush2.msra.mxu0 0.0
    %741 = vmatprep.subr.mxu0 0.0
    %742 = vmatpush2.msra.mxu0 0.0
    %743 = vmatprep.subr.mxu0 0.0
    %744 = vmatpush2.msra.mxu0 0.0
    %745 = vmatprep.subr.mxu0 0.0
    %746 = vmatpush2.msra.mxu0 0.0
    %747 = vmatprep.subr.mxu0 0.0
    %748 = vmatpush2.msra.mxu0 0.0
    %749 = vmatprep.subr.mxu0 0.0
    %750 = vmatpush2.msra.mxu0 %v697
    %751 = vmatprep.subr.mxu0 0.0
    %752 = vmatpush2.msra.mxu0 %v668
    %753 = vmatprep.subr.mxu0 0.0
    %754 = vmatpush2.msra.mxu0 %v667
    %755 = vmatprep.subr.mxu0 0.0
    %756 = vmatpush2.msra.mxu0 %v666
    %757 = vmatprep.subr.mxu0 0.0
    %758 = vmatpush2.msra.mxu0 %v665
    %759 = vmatprep.subr.mxu0 0.0
    %760 = vmatpush2.msra.mxu0 %v664
    %761 = vmatprep.subr.mxu0 0.0
    %762 = vmatpush2.msra.mxu0 %v663
    %763 = vmatprep.mubr.f32.mxu0 %v672
    %764 = vmatmul.mubr.f32.gmra.mxu0 %v631
    %v765 = vpop.f32.mrf.mxu0
    %v766 = vadd.f32 0.0, %v765
    %v767 = vpop.f32.mrf.mxu0
    %768 = vmatprep.mubr.f32.mxu0 %v675
    %769 = vmatmul.mubr.f32.gmra.mxu0 %v633
    %v770 = vpop.f32.mrf.mxu0
    %v771 = vadd.f32 0.0, %v770
    %v772 = vpop.f32.mrf.mxu0
    %773 = vmatprep.mubr.f32.mxu0 %v678
    %774 = vmatmul.mubr.f32.gmra.mxu0 %v635
    %v775 = vpop.f32.mrf.mxu0
    %v776 = vadd.f32 0.0, %v775
    %v777 = vpop.f32.mrf.mxu0
    %778 = vmatprep.mubr.f32.mxu0 %v681
    %779 = vmatmul.mubr.f32.gmra.mxu0 %v637
    %v780 = vpop.f32.mrf.mxu0
    %v781 = vadd.f32 0.0, %v780
    %v782 = vpop.f32.mrf.mxu0
    %783 = vmatprep.mubr.f32.mxu0 %v684
    %784 = vmatmul.mubr.f32.gmra.mxu0 %v639
    %v785 = vpop.f32.mrf.mxu0
    %v786 = vadd.f32 0.0, %v785
    %v787 = vpop.f32.mrf.mxu0
    %788 = vmatprep.mubr.f32.mxu0 %v687
    %789 = vmatmul.mubr.f32.gmra.mxu0 %v641
    %v790 = vpop.f32.mrf.mxu0
    %v791 = vadd.f32 0.0, %v790
    %v792 = vpop.f32.mrf.mxu0
    %793 = vmatprep.mubr.f32.mxu0 %v690
    %794 = vmatmul.mubr.f32.gmra.mxu0 %v643
    %v795 = vpop.f32.mrf.mxu0
    %v796 = vadd.f32 0.0, %v795
    %v797 = vpop.f32.mrf.mxu0
    %798 = vmatprep.mubr.f32.mxu0 %v693
    %799 = vmatmul.mubr.f32.gmra.mxu0 %v645
    %v800 = vpop.f32.mrf.mxu0
    %v801 = vadd.f32 0.0, %v800
    %v802 = vpop.f32.mrf.mxu0
    %803 = vdwg.mxu0
    %v812 = vrot.slane %v766, 1
    %v813 = vrot.slane %v771, 1
    %v814 = vsel %vm69, %v812, %v813
    %v815 = vrot.slane %v776, 1
    %v816 = vsel %vm69, %v813, %v815
    %v817 = vrot.slane %v781, 1
    %v818 = vsel %vm69, %v815, %v817
    %v819 = vrot.slane %v786, 1
    %v820 = vsel %vm69, %v817, %v819
    %v821 = vrot.slane %v791, 1
    %v822 = vsel %vm69, %v819, %v821
    %v823 = vrot.slane %v796, 1
    %v824 = vsel %vm69, %v821, %v823
    %v825 = vrot.slane %v801, 1
    %v826 = vsel %vm69, %v823, %v825
    %v835 = vmax.f32 %v766, %v814
    %v836 = vmax.f32 %v771, %v816
    %v837 = vmax.f32 %v776, %v818
    %v838 = vmax.f32 %v781, %v820
    %v839 = vmax.f32 %v786, %v822
    %v840 = vmax.f32 %v791, %v824
    %v841 = vmax.f32 %v796, %v826
    %v842 = vmax.f32 %v801, %v825
    %v843 = vld [vmem:[%s4] sm:$0xff]
    %v844 = vld [vmem:[%s4 + $0x8] sm:$0xff]
    %v845 = vld [vmem:[%s4 + $0x10] sm:$0xff]
    %v846 = vld [vmem:[%s4 + $0x18] sm:$0x3f]
    %vm847 = vcmask 498688
    %v849 = vsel %vm847, %v843, 0
    %v852 = vsel %vm847, %v844, 0
    %v855 = vsel %vm847, %v845, 0
    %v858 = vsel %vm847, %v846, 0
    %vm860 = vcmask 1044480
    %v862 = vsel %vm860, %v842, 0
    %864 = vmatprep.subr.mxu0 0.0
    %865 = vmatpush1.msra.mxu0 0.0
    %866 = vmatprep.subr.mxu0 0.0
    %867 = vmatpush1.msra.mxu0 0.0
    %868 = vmatprep.subr.mxu0 0.0
    %869 = vmatpush1.msra.mxu0 0.0
    %870 = vmatprep.subr.mxu0 0.0
    %871 = vmatpush1.msra.mxu0 0.0
    %872 = vmatprep.subr.mxu0 0.0
    %873 = vmatpush1.msra.mxu0 0.0
    %874 = vmatprep.subr.mxu0 0.0
    %875 = vmatpush1.msra.mxu0 0.0
    %876 = vmatprep.subr.mxu0 0.0
    %877 = vmatpush1.msra.mxu0 0.0
    %878 = vmatprep.subr.mxu0 0.0
    %879 = vmatpush1.msra.mxu0 0.0
    %880 = vmatprep.subr.mxu0 0.0
    %881 = vmatpush1.msra.mxu0 %v862
    %882 = vmatprep.subr.mxu0 0.0
    %883 = vmatpush1.msra.mxu0 %v841
    %884 = vmatprep.subr.mxu0 0.0
    %885 = vmatpush1.msra.mxu0 %v840
    %886 = vmatprep.subr.mxu0 0.0
    %887 = vmatpush1.msra.mxu0 %v839
    %888 = vmatprep.subr.mxu0 0.0
    %889 = vmatpush1.msra.mxu0 %v838
    %890 = vmatprep.subr.mxu0 0.0
    %891 = vmatpush1.msra.mxu0 %v837
    %892 = vmatprep.subr.mxu0 0.0
    %893 = vmatpush1.msra.mxu0 %v836
    %894 = vmatprep.subr.mxu0 0.0
    %895 = vmatpush1.msra.mxu0 %v835
    %896 = vmatprep.subr.mxu0 0.0
    %897 = vmatpush2.msra.mxu0 0.0
    %898 = vmatprep.subr.mxu0 0.0
    %899 = vmatpush2.msra.mxu0 0.0
    %900 = vmatprep.subr.mxu0 0.0
    %901 = vmatpush2.msra.mxu0 0.0
    %902 = vmatprep.subr.mxu0 0.0
    %903 = vmatpush2.msra.mxu0 0.0
    %904 = vmatprep.subr.mxu0 0.0
    %905 = vmatpush2.msra.mxu0 0.0
    %906 = vmatprep.subr.mxu0 0.0
    %907 = vmatpush2.msra.mxu0 0.0
    %908 = vmatprep.subr.mxu0 0.0
    %909 = vmatpush2.msra.mxu0 0.0
    %910 = vmatprep.subr.mxu0 0.0
    %911 = vmatpush2.msra.mxu0 0.0
    %912 = vmatprep.subr.mxu0 0.0
    %913 = vmatpush2.msra.mxu0 0.0
    %914 = vmatprep.subr.mxu0 0.0
    %915 = vmatpush2.msra.mxu0 0.0
    %916 = vmatprep.subr.mxu0 0.0
    %917 = vmatpush2.msra.mxu0 0.0
    %918 = vmatprep.subr.mxu0 0.0
    %919 = vmatpush2.msra.mxu0 0.0
    %920 = vmatprep.subr.mxu0 0.0
    %921 = vmatpush2.msra.mxu0 0.0
    %922 = vmatprep.subr.mxu0 0.0
    %923 = vmatpush2.msra.mxu0 0.0
    %924 = vmatprep.subr.mxu0 0.0
    %925 = vmatpush2.msra.mxu0 0.0
    %926 = vmatprep.subr.mxu0 0.0
    %927 = vmatpush2.msra.mxu0 0.0
    %928 = vmatprep.mubr.f32.mxu0 0.0
    %929 = vmatmul.mubr.f32.gmra.mxu0 %v849
    %v930 = vpop.f32.mrf.mxu0
    %v931 = vadd.f32 0.0, %v930
    %v932 = vpop.f32.mrf.mxu0
    %933 = vmatprep.mubr.f32.mxu0 0.0
    %934 = vmatmul.mubr.f32.gmra.mxu0 %v852
    %v935 = vpop.f32.mrf.mxu0
    %v936 = vadd.f32 0.0, %v935
    %v937 = vpop.f32.mrf.mxu0
    %938 = vmatprep.mubr.f32.mxu0 0.0
    %939 = vmatmul.mubr.f32.gmra.mxu0 %v855
    %v940 = vpop.f32.mrf.mxu0
    %v941 = vadd.f32 0.0, %v940
    %v942 = vpop.f32.mrf.mxu0
    %943 = vmatprep.mubr.f32.mxu0 0.0
    %944 = vmatmul.mubr.f32.gmra.mxu0 %v858
    %v945 = vpop.f32.mrf.mxu0
    %v946 = vadd.f32 0.0, %v945
    %v947 = vpop.f32.mrf.mxu0
    %948 = vdwg.mxu0
    %v949 = vld [vmem:[%s5] sm:$0xff]
    %v950 = vld [vmem:[%s5 + $0x8] sm:$0xff]
    %v951 = vld [vmem:[%s5 + $0x10] sm:$0xff]
    %v952 = vld [vmem:[%s5 + $0x18] sm:$0xff]
    %v953 = vld [vmem:[%s5 + $0x20] sm:$0xff]
    %v954 = vld [vmem:[%s5 + $0x28] sm:$0xff]
    %v955 = vld [vmem:[%s5 + $0x30] sm:$0xff]
    %v956 = vld [vmem:[%s5 + $0x38] sm:$0xff]
    %v957 = vld [vmem:[%s5 + $0x40] sm:$0xff]
    %v958 = vld [vmem:[%s5 + $0x48] sm:$0xff]
    %v959 = vld [vmem:[%s5 + $0x50] sm:$0xff]
    %v960 = vld [vmem:[%s5 + $0x58] sm:$0xff]
    %v961 = vld [vmem:[%s5 + $0x60] sm:$0xff]
    %v962 = vld [vmem:[%s5 + $0x68] sm:$0xff]
    %v963 = vld [vmem:[%s5 + $0x70] sm:$0xff]
    %v964 = vld [vmem:[%s5 + $0x78] sm:$0xff]
    %v965 = vld [vmem:[%s5 + $0x80] sm:$0xff]
    %v966 = vld [vmem:[%s5 + $0x88] sm:$0xff]
    %v967 = vld [vmem:[%s5 + $0x90] sm:$0xff]
    %v968 = vld [vmem:[%s5 + $0x98] sm:$0xff]
    %v969 = vld [vmem:[%s5 + $0xa0] sm:$0xff]
    %v970 = vld [vmem:[%s5 + $0xa8] sm:$0xff]
    %v971 = vld [vmem:[%s5 + $0xb0] sm:$0x3]
    %v972 = vld [vmem:[%s5 + $0xb8] sm:$0x3]
    %vm973 = vcmask 736256
    %v975 = vsel %vm973, %v931, 0
    %v978 = vsel %vm973, %v936, 0
    %v981 = vsel %vm973, %v941, 0
    %v984 = vsel %vm973, %v946, 0
    %vm986 = vcmask 1041408
    %v988 = vsel %vm986, %v971, 0
    %v991 = vsel %vm986, %v972, 0
    %993 = vmatprep.subr.mxu0 0.0
    %994 = vmatpush1.msra.mxu0 0.0
    %995 = vmatprep.subr.mxu0 0.0
    %996 = vmatpush1.msra.mxu0 0.0
    %997 = vmatprep.subr.mxu0 0.0
    %998 = vmatpush1.msra.mxu0 0.0
    %999 = vmatprep.subr.mxu0 0.0
    %1000 = vmatpush1.msra.mxu0 0.0
    %1001 = vmatprep.subr.mxu0 %v991
    %1002 = vmatpush1.msra.mxu0 %v988
    %1003 = vmatprep.subr.mxu0 %v970
    %1004 = vmatpush1.msra.mxu0 %v969
    %1005 = vmatprep.subr.mxu0 %v968
    %1006 = vmatpush1.msra.mxu0 %v967
    %1007 = vmatprep.subr.mxu0 %v966
    %1008 = vmatpush1.msra.mxu0 %v965
    %1009 = vmatprep.subr.mxu0 %v964
    %1010 = vmatpush1.msra.mxu0 %v963
    %1011 = vmatprep.subr.mxu0 %v962
    %1012 = vmatpush1.msra.mxu0 %v961
    %1013 = vmatprep.subr.mxu0 %v960
    %1014 = vmatpush1.msra.mxu0 %v959
    %1015 = vmatprep.subr.mxu0 %v958
    %1016 = vmatpush1.msra.mxu0 %v957
    %1017 = vmatprep.subr.mxu0 %v956
    %1018 = vmatpush1.msra.mxu0 %v955
    %1019 = vmatprep.subr.mxu0 %v954
    %1020 = vmatpush1.msra.mxu0 %v953
    %1021 = vmatprep.subr.mxu0 %v952
    %1022 = vmatpush1.msra.mxu0 %v951
    %1023 = vmatprep.subr.mxu0 %v950
    %1024 = vmatpush1.msra.mxu0 %v949
    %1025 = vmatprep.subr.mxu0 0.0
    %1026 = vmatpush2.msra.mxu0 0.0
    %1027 = vmatprep.subr.mxu0 0.0
    %1028 = vmatpush2.msra.mxu0 0.0
    %1029 = vmatprep.subr.mxu0 0.0
    %1030 = vmatpush2.msra.mxu0 0.0
    %1031 = vmatprep.subr.mxu0 0.0
    %1032 = vmatpush2.msra.mxu0 0.0
    %1033 = vmatprep.subr.mxu0 0.0
    %1034 = vmatpush2.msra.mxu0 0.0
    %1035 = vmatprep.subr.mxu0 0.0
    %1036 = vmatpush2.msra.mxu0 0.0
    %1037 = vmatprep.subr.mxu0 0.0
    %1038 = vmatpush2.msra.mxu0 0.0
    %1039 = vmatprep.subr.mxu0 0.0
    %1040 = vmatpush2.msra.mxu0 0.0
    %1041 = vmatprep.subr.mxu0 0.0
    %1042 = vmatpush2.msra.mxu0 0.0
    %1043 = vmatprep.subr.mxu0 0.0
    %1044 = vmatpush2.msra.mxu0 0.0
    %1045 = vmatprep.subr.mxu0 0.0
    %1046 = vmatpush2.msra.mxu0 0.0
    %1047 = vmatprep.subr.mxu0 0.0
    %1048 = vmatpush2.msra.mxu0 0.0
    %1049 = vmatprep.subr.mxu0 0.0
    %1050 = vmatpush2.msra.mxu0 0.0
    %1051 = vmatprep.subr.mxu0 0.0
    %1052 = vmatpush2.msra.mxu0 0.0
    %1053 = vmatprep.subr.mxu0 0.0
    %1054 = vmatpush2.msra.mxu0 0.0
    %1055 = vmatprep.subr.mxu0 0.0
    %1056 = vmatpush2.msra.mxu0 0.0
    %1057 = vmatprep.mubr.f32.mxu0 0.0
    %1058 = vmatmul.mubr.f32.gmra.mxu0 %v975
    %v1059 = vpop.f32.mrf.mxu0
    %v1060 = vadd.f32 0.0, %v1059
    %v1061 = vpop.f32.mrf.mxu0
    %v1062 = vadd.f32 0.0, %v1061
    %1063 = vmatprep.mubr.f32.mxu0 0.0
    %1064 = vmatmul.mubr.f32.gmra.mxu0 %v978
    %v1065 = vpop.f32.mrf.mxu0
    %v1066 = vadd.f32 0.0, %v1065
    %v1067 = vpop.f32.mrf.mxu0
    %v1068 = vadd.f32 0.0, %v1067
    %1069 = vmatprep.mubr.f32.mxu0 0.0
    %1070 = vmatmul.mubr.f32.gmra.mxu0 %v981
    %v1071 = vpop.f32.mrf.mxu0
    %v1072 = vadd.f32 0.0, %v1071
    %v1073 = vpop.f32.mrf.mxu0
    %v1074 = vadd.f32 0.0, %v1073
    %1075 = vmatprep.mubr.f32.mxu0 0.0
    %1076 = vmatmul.mubr.f32.gmra.mxu0 %v984
    %v1077 = vpop.f32.mrf.mxu0
    %v1078 = vadd.f32 0.0, %v1077
    %v1079 = vpop.f32.mrf.mxu0
    %v1080 = vadd.f32 0.0, %v1079
    %1081 = vdwg.mxu0
    %v1082 = vld [vmem:[%s7] sm:$0x3]
    %v1083 = vld [vmem:[%s6] sm:$0xff]
    %v1084 = vld [vmem:[%s6 + $0x8] sm:$0xff]
    %v1085 = vld [vmem:[%s6 + $0x10] sm:$0xff]
    %v1086 = vld [vmem:[%s6 + $0x18] sm:$0xff]
    %v1087 = vld [vmem:[%s6 + $0x20] sm:$0xff]
    %v1088 = vld [vmem:[%s6 + $0x28] sm:$0xff]
    %v1089 = vld [vmem:[%s6 + $0x30] sm:$0x3f]
    %v1090 = vld [vmem:[%s6 + $0x38] sm:$0x3f]
    %v1091 = vmul.f32 %v1060, %v1083
    %v1092 = vmul.f32 %v1062, %v1084
    %v1093 = vmul.f32 %v1066, %v1085
    %v1094 = vmul.f32 %v1068, %v1086
    %v1095 = vmul.f32 %v1072, %v1087
    %v1096 = vmul.f32 %v1074, %v1088
    %v1097 = vmul.f32 %v1078, %v1089
    %v1098 = vmul.f32 %v1080, %v1090
    %vm1099 = vcmask 244736
    %v1101 = vsel %vm1099, %v1082, 0
    %v1104 = vsel %vm353, %v1097, 0
    %v1107 = vsel %vm353, %v1098, 0
    %1109 = vmatprep.subr.mxu0 0.0
    %1110 = vmatpush1.msra.mxu0 0.0
    %1111 = vmatprep.subr.mxu0 0.0
    %1112 = vmatpush1.msra.mxu0 0.0
    %1113 = vmatprep.subr.mxu0 0.0
    %1114 = vmatpush1.msra.mxu0 0.0
    %1115 = vmatprep.subr.mxu0 0.0
    %1116 = vmatpush1.msra.mxu0 0.0
    %1117 = vmatprep.subr.mxu0 0.0
    %1118 = vmatpush1.msra.mxu0 0.0
    %1119 = vmatprep.subr.mxu0 0.0
    %1120 = vmatpush1.msra.mxu0 0.0
    %1121 = vmatprep.subr.mxu0 0.0
    %1122 = vmatpush1.msra.mxu0 0.0
    %1123 = vmatprep.subr.mxu0 0.0
    %1124 = vmatpush1.msra.mxu0 0.0
    %1125 = vmatprep.subr.mxu0 0.0
    %1126 = vmatpush1.msra.mxu0 0.0
    %1127 = vmatprep.subr.mxu0 0.0
    %1128 = vmatpush1.msra.mxu0 0.0
    %1129 = vmatprep.subr.mxu0 0.0
    %1130 = vmatpush1.msra.mxu0 0.0
    %1131 = vmatprep.subr.mxu0 0.0
    %1132 = vmatpush1.msra.mxu0 0.0
    %1133 = vmatprep.subr.mxu0 %v1107
    %1134 = vmatpush1.msra.mxu0 %v1104
    %1135 = vmatprep.subr.mxu0 %v1096
    %1136 = vmatpush1.msra.mxu0 %v1095
    %1137 = vmatprep.subr.mxu0 %v1094
    %1138 = vmatpush1.msra.mxu0 %v1093
    %1139 = vmatprep.subr.mxu0 %v1092
    %1140 = vmatpush1.msra.mxu0 %v1091
    %1141 = vmatprep.subr.mxu0 0.0
    %1142 = vmatpush2.msra.mxu0 0.0
    %1143 = vmatprep.subr.mxu0 0.0
    %1144 = vmatpush2.msra.mxu0 0.0
    %1145 = vmatprep.subr.mxu0 0.0
    %1146 = vmatpush2.msra.mxu0 0.0
    %1147 = vmatprep.subr.mxu0 0.0
    %1148 = vmatpush2.msra.mxu0 0.0
    %1149 = vmatprep.subr.mxu0 0.0
    %1150 = vmatpush2.msra.mxu0 0.0
    %1151 = vmatprep.subr.mxu0 0.0
    %1152 = vmatpush2.msra.mxu0 0.0
    %1153 = vmatprep.subr.mxu0 0.0
    %1154 = vmatpush2.msra.mxu0 0.0
    %1155 = vmatprep.subr.mxu0 0.0
    %1156 = vmatpush2.msra.mxu0 0.0
    %1157 = vmatprep.subr.mxu0 0.0
    %1158 = vmatpush2.msra.mxu0 0.0
    %1159 = vmatprep.subr.mxu0 0.0
    %1160 = vmatpush2.msra.mxu0 0.0
    %1161 = vmatprep.subr.mxu0 0.0
    %1162 = vmatpush2.msra.mxu0 0.0
    %1163 = vmatprep.subr.mxu0 0.0
    %1164 = vmatpush2.msra.mxu0 0.0
    %1165 = vmatprep.subr.mxu0 0.0
    %1166 = vmatpush2.msra.mxu0 0.0
    %1167 = vmatprep.subr.mxu0 0.0
    %1168 = vmatpush2.msra.mxu0 0.0
    %1169 = vmatprep.subr.mxu0 0.0
    %1170 = vmatpush2.msra.mxu0 0.0
    %1171 = vmatprep.subr.mxu0 0.0
    %1172 = vmatpush2.msra.mxu0 0.0
    %1173 = vmatprep.mubr.f32.mxu0 0.0
    %1174 = vmatmul.mubr.f32.gmra.mxu0 %v1101
    %v1175 = vpop.f32.mrf.mxu0
    %v1176 = vadd.f32 0.0, %v1175
    %v1177 = vpop.f32.mrf.mxu0
    %v1178 = vadd.f32 0.0, %v1177
    %1179 = vdwg.mxu0
    %v1180 = vld [vmem:[%s8] sm:$0xff]
    %v1181 = vld [vmem:[%s8 + $0x8] sm:$0xff]
    %v1182 = vld [vmem:[%s8 + $0x10] sm:$0xff]
    %v1183 = vld [vmem:[%s8 + $0x18] sm:$0xff]
    %v1184 = vld [vmem:[%s8 + $0x20] sm:$0xff]
    %v1185 = vld [vmem:[%s8 + $0x28] sm:$0xff]
    %v1186 = vld [vmem:[%s8 + $0x30] sm:$0xff]
    %v1187 = vld [vmem:[%s8 + $0x38] sm:$0xff]
    %v1188 = vld [vmem:[%s8 + $0x40] sm:$0xff]
    %v1189 = vld [vmem:[%s8 + $0x48] sm:$0xff]
    %v1190 = vld [vmem:[%s8 + $0x50] sm:$0xff]
    %v1191 = vld [vmem:[%s8 + $0x58] sm:$0xff]
    %v1192 = vld [vmem:[%s8 + $0x60] sm:$0xff]
    %v1193 = vld [vmem:[%s8 + $0x68] sm:$0xff]
    %v1194 = vld [vmem:[%s8 + $0x70] sm:$0xff]
    %v1195 = vld [vmem:[%s8 + $0x78] sm:$0xff]
    %v1196 = vld [vmem:[%s8 + $0x80] sm:$0xff]
    %v1197 = vld [vmem:[%s8 + $0x88] sm:$0xff]
    %v1198 = vld [vmem:[%s8 + $0x90] sm:$0x3f]
    %v1199 = vld [vmem:[%s9] sm:$0x1]
    %v1201 = vlaneseq
    %v1202 = vshrl.u32 %v1201, 7
    %v1203 = vsub.s32 0, %v1202
    %v1204 = vrot.slane %v1199, %v1203
    %vm1206 = vcmask 179200
    %v1208 = vsel %vm1206, %v1178, 0
    %v1211 = vsel %vm353, %v1198, 0
    %1213 = vmatprep.subr.mxu0 0.0
    %1214 = vmatpush1.msra.mxu0 %v1195
    %1215 = vmatprep.subr.mxu0 0.0
    %1216 = vmatpush1.msra.mxu0 %v1194
    %1217 = vmatprep.subr.mxu0 0.0
    %1218 = vmatpush1.msra.mxu0 %v1193
    %1219 = vmatprep.subr.mxu0 0.0
    %1220 = vmatpush1.msra.mxu0 %v1192
    %1221 = vmatprep.subr.mxu0 0.0
    %1222 = vmatpush1.msra.mxu0 %v1191
    %1223 = vmatprep.subr.mxu0 0.0
    %1224 = vmatpush1.msra.mxu0 %v1190
    %1225 = vmatprep.subr.mxu0 0.0
    %1226 = vmatpush1.msra.mxu0 %v1189
    %1227 = vmatprep.subr.mxu0 0.0
    %1228 = vmatpush1.msra.mxu0 %v1188
    %1229 = vmatprep.subr.mxu0 0.0
    %1230 = vmatpush1.msra.mxu0 %v1187
    %1231 = vmatprep.subr.mxu0 0.0
    %1232 = vmatpush1.msra.mxu0 %v1186
    %1233 = vmatprep.subr.mxu0 0.0
    %1234 = vmatpush1.msra.mxu0 %v1185
    %1235 = vmatprep.subr.mxu0 0.0
    %1236 = vmatpush1.msra.mxu0 %v1184
    %1237 = vmatprep.subr.mxu0 0.0
    %1238 = vmatpush1.msra.mxu0 %v1183
    %1239 = vmatprep.subr.mxu0 0.0
    %1240 = vmatpush1.msra.mxu0 %v1182
    %1241 = vmatprep.subr.mxu0 0.0
    %1242 = vmatpush1.msra.mxu0 %v1181
    %1243 = vmatprep.subr.mxu0 0.0
    %1244 = vmatpush1.msra.mxu0 %v1180
    %1245 = vmatprep.subr.mxu0 0.0
    %1246 = vmatpush2.msra.mxu0 0.0
    %1247 = vmatprep.subr.mxu0 0.0
    %1248 = vmatpush2.msra.mxu0 0.0
    %1249 = vmatprep.subr.mxu0 0.0
    %1250 = vmatpush2.msra.mxu0 0.0
    %1251 = vmatprep.subr.mxu0 0.0
    %1252 = vmatpush2.msra.mxu0 0.0
    %1253 = vmatprep.subr.mxu0 0.0
    %1254 = vmatpush2.msra.mxu0 0.0
    %1255 = vmatprep.subr.mxu0 0.0
    %1256 = vmatpush2.msra.mxu0 0.0
    %1257 = vmatprep.subr.mxu0 0.0
    %1258 = vmatpush2.msra.mxu0 0.0
    %1259 = vmatprep.subr.mxu0 0.0
    %1260 = vmatpush2.msra.mxu0 0.0
    %1261 = vmatprep.subr.mxu0 0.0
    %1262 = vmatpush2.msra.mxu0 0.0
    %1263 = vmatprep.subr.mxu0 0.0
    %1264 = vmatpush2.msra.mxu0 0.0
    %1265 = vmatprep.subr.mxu0 0.0
    %1266 = vmatpush2.msra.mxu0 0.0
    %1267 = vmatprep.subr.mxu0 0.0
    %1268 = vmatpush2.msra.mxu0 0.0
    %1269 = vmatprep.subr.mxu0 0.0
    %1270 = vmatpush2.msra.mxu0 0.0
    %1271 = vmatprep.subr.mxu0 0.0
    %1272 = vmatpush2.msra.mxu0 %v1211
    %1273 = vmatprep.subr.mxu0 0.0
    %1274 = vmatpush2.msra.mxu0 %v1197
    %1275 = vmatprep.subr.mxu0 0.0
    %1276 = vmatpush2.msra.mxu0 %v1196
    %1277 = vmatprep.mubr.f32.mxu0 %v1208
    %1278 = vmatmul.mubr.f32.gmra.mxu0 %v1176
    %v1279 = vpop.f32.mrf.mxu0
    %v1280 = vadd.f32 %v1204, %v1279
    %v1281 = vpop.f32.mrf.mxu0
    %1282 = vdwg.mxu0
    %vm1283 = vcmask 74752
    %1284 = vst.msk [vmem:[#allocation2] sm:$0x3] %vm1283, %v1280
    // Predicated region
    $region42: #{net_forward.1} parent=1 // pred_check
      _
    $region43: #{net_forward.1} parent=1 // pred_check_branch
      %1286 = sbr.rel (0) target = $region45
    $region44: #{net_forward.1} parent=1 // pred_region
      %s1288 = ssub.s32 32, 32
      %1289 = vsyncadd [#allocation3], %s1288
      %s1291 = sshll.u32 [#allocation2], 4
      %s1292 = int_to_ptr.vmem [resolvable:$true] %s1291
      %1294 = dma.vmem_to_hbm [thread:$0]  %s1292, 32, %s10, [#allocation3]
    $region45: #{net_forward.1} parent=1 // pred_fallthru
      _
    // Predicated region
    $region46: #{net_forward.1} parent=1 // pred_check
      _
    $region47: #{net_forward.1} parent=1 // pred_check_branch
      %1296 = sbr.rel (0) target = $region49
    $region48: #{net_forward.1} parent=1 // pred_region
      %1297 = dma.done [#allocation3], 32
    $region49: #{net_forward.1} parent=1 // pred_fallthru
      _
    %1298 = vsyncpa [#allocation3], 1

</llo_original>
